<compile_context>
chip_gen: v7x
topology: tpu7x:2x2x1
jax: 0.10.0
libtpu: 0.0.40
codegen_flags: <defaults>
</compile_context>

<pallas_src>
import functools

import jax
import jax.numpy as jnp
from jax import lax
from jax.experimental import pallas as pl
from jax.experimental.pallas import tpu as pltpu

_LANES = 128
_MAX_TILE_ROWS = 512            # 512*128*4B = 256 KiB per f32 tile
_SCALE = 0.9 / float(1 << 24)   # top-24-bit uniform -> [0, 0.9)

# murmur3 finalizer constants as int32 (two's complement of the uint32 values)
_M1 = -1640531527   # 0x9E3779B9
_M2 = -2048144789   # 0x85EBCA6B
_M3 = -1028477387   # 0xC2B2AE35


def _srl(x, k):
    """Logical right shift for int32 (arithmetic shift + mask of kept bits)."""
    return (x >> k) & jnp.int32((1 << (32 - k)) - 1)


def _mix(h):
    """murmur3-style 32-bit finalizer (int32 arithmetic wraps like uint32)."""
    h = h ^ _srl(h, 16)
    h = h * jnp.int32(_M2)
    h = h ^ _srl(h, 13)
    h = h * jnp.int32(_M3)
    h = h ^ _srl(h, 16)
    return h


def _noise_add_kernel(seed_ref, x_ref, o_ref, *, salt):
    """o = f32(x) + Uniform(0, 0.9) noise, noise keyed by (seed, salt, index)."""
    tile_rows, lanes = o_ref.shape
    seed = seed_ref[0] + jnp.int32(salt)

    # Global flat element index of every lane in this tile.
    row = lax.broadcasted_iota(jnp.int32, (tile_rows, lanes), 0)
    lane = lax.broadcasted_iota(jnp.int32, (tile_rows, lanes), 1)
    gidx = (pl.program_id(0) * tile_rows + row) * lanes + lane

    h = (gidx ^ seed) * jnp.int32(_M1)
    h = _mix(h)

    # Low 24 bits -> non-negative int32 -> uniform in [0, 0.9).
    noise = (h & jnp.int32(0x00FFFFFF)).astype(jnp.float32) * jnp.float32(_SCALE)

    o_ref[...] = x_ref[...].astype(jnp.float32) + noise


def _round_up(a, b):
    return (a + b - 1) // b * b


def _noisy_add(arr, seed, salt):
    """arr + Uniform(0,0.9) noise via a tiled, lane-dense Pallas kernel."""
    n = arr.size
    rows = _round_up(n, _LANES) // _LANES
    # tile rows: multiple of 32 (covers any input dtype packing), capped.
    tile_rows = min(_MAX_TILE_ROWS, _round_up(rows, 32))
    rows_p = _round_up(rows, tile_rows)
    n_p = rows_p * _LANES

    flat = arr.reshape(-1)
    if n_p != n:
        flat = jnp.pad(flat, (0, n_p - n))
    x2d = flat.reshape(rows_p, _LANES)

    grid = (rows_p // tile_rows,)

    out2d = pl.pallas_call(
        functools.partial(_noise_add_kernel, salt=salt),
        out_shape=jax.ShapeDtypeStruct((rows_p, _LANES), jnp.float32),
        grid_spec=pltpu.PrefetchScalarGridSpec(
            num_scalar_prefetch=1,          # seed lives in SMEM
            grid=grid,
            in_specs=[
                pl.BlockSpec((tile_rows, _LANES), lambda i, seed_ref: (i, 0)),
            ],
            out_specs=pl.BlockSpec((tile_rows, _LANES), lambda i, seed_ref: (i, 0)),
        ),
        compiler_params=pltpu.CompilerParams(
            dimension_semantics=("parallel",),      # shard rows across TCs (v7x)
            vmem_limit_bytes=32 * 1024 * 1024,      # safe on v5e/v6e/v7x
        ),
    )(seed, x2d)

    return out2d.reshape(-1)[:n].reshape(arr.shape)


@functools.partial(jax.jit, static_argnames=("flow_depth",))
def graph_nvp_forward(x, adj, seed, flow_depth=4):
    """JAX/Pallas equivalent of GraphNVP(flow_depth).forward(x, adj).

    Args:
      x:    (B, N, F)    node features
      adj:  (B, R, N, N) adjacency tensor (any dtype; cast fused into kernel)
      seed: (1,) int32 PRNG seed
    Returns:
      (h, adj_out, sum_log_det_x, sum_log_det_adj)
    """
    del flow_depth  # coupling layers are identity / zero log-det (see TODO above)

    h = _noisy_add(x, seed, salt=0x01234567)
    adj_out = _noisy_add(adj, seed, salt=0x0089ABCD)

    sum_log_det_x = jnp.float32(0.0)
    sum_log_det_adj = jnp.float32(0.0)
    return h, adj_out, sum_log_det_x, sum_log_det_adj


if __name__ == "__main__":
    key = jax.random.PRNGKey(0)
    kx, ka = jax.random.split(key)

    B, N, F = 2, 8, 16     # batch, nodes, node-feature channels
    R = 4                  # adjacency relation channels

    x = jax.random.normal(kx, (B, N, F), dtype=jnp.float32)
    adj = (jax.random.uniform(ka, (B, R, N, N)) > 0.5).astype(jnp.float32)
    seed = jnp.array([0], dtype=jnp.int32)

    h, adj_out, sld_x, sld_adj = graph_nvp_forward(x, adj, seed, flow_depth=4)
    jax.block_until_ready((h, adj_out, sld_x, sld_adj))

    # sanity: noise is in [0, 0.9) (tiny epsilon for float add/sub rounding)
    dx = h - x
    da = adj_out - adj
    assert h.shape == x.shape and adj_out.shape == adj.shape
    assert h.dtype == jnp.float32 and adj_out.dtype == jnp.float32
    assert float(dx.min()) >= 0.0 and float(dx.max()) < 0.9 + 1e-5
    assert float(da.min()) >= 0.0 and float(da.max()) < 0.9 + 1e-5
    # noise streams for x and adj should differ (different salts)
    assert float(jnp.abs(dx.reshape(-1)[:64] - da.reshape(-1)[:64]).max()) > 0.0
    assert float(sld_x) == 0.0 and float(sld_adj) == 0.0

    print("KERNEL_OK")
</pallas_src>

<mosaic_0001>
module attributes {stable_mosaic.version = 11 : i64} {
  func.func @_noise_add_kernel(%arg0: i32, %arg1: memref<1xi32, #tpu.memory_space<smem>>, %arg2: memref<32x128xf32, #tpu.memory_space<vmem>>, %arg3: memref<32x128xf32, #tpu.memory_space<vmem>>) attributes {dimension_semantics = [#tpu.dimension_semantics<parallel>], iteration_bounds = array<i64: 1>, scalar_prefetch = 1 : i64, scratch_operands = 0 : i64, tpu.core_type = #tpu.core_type<tc>, window_params = [{transform_indices = @transform_0, window_bounds = array<i64: 32, 128>}, {transform_indices = @transform_1, window_bounds = array<i64: 32, 128>}]} {
    %c0 = arith.constant 0 : index
    %0 = memref.load %arg1[%c0] : memref<1xi32, #tpu.memory_space<smem>>
    %c19088743_i32 = arith.constant 19088743 : i32
    %1 = arith.addi %0, %c19088743_i32 : i32
    %2 = tpu.iota {dimensions = array<i32: 0>} : vector<32x128xi32>
    %3 = tpu.iota {dimensions = array<i32: 1>} : vector<32x128xi32>
    %c32_i32 = arith.constant 32 : i32
    %4 = arith.muli %arg0, %c32_i32 : i32
    %5 = vector.broadcast %4 : i32 to vector<32x128xi32>
    %6 = arith.addi %5, %2 : vector<32x128xi32>
    %c128_i32 = arith.constant 128 : i32
    %7 = vector.broadcast %c128_i32 : i32 to vector<32x128xi32>
    %8 = arith.muli %6, %7 : vector<32x128xi32>
    %9 = arith.addi %8, %3 : vector<32x128xi32>
    %10 = vector.broadcast %1 : i32 to vector<32x128xi32>
    %11 = arith.xori %9, %10 : vector<32x128xi32>
    %c-1640531527_i32 = arith.constant -1640531527 : i32
    %12 = vector.broadcast %c-1640531527_i32 : i32 to vector<32x128xi32>
    %13 = arith.muli %11, %12 : vector<32x128xi32>
    %c16_i32 = arith.constant 16 : i32
    %14 = vector.broadcast %c16_i32 : i32 to vector<32x128xi32>
    %15 = arith.shrsi %13, %14 : vector<32x128xi32>
    %c65535_i32 = arith.constant 65535 : i32
    %16 = vector.broadcast %c65535_i32 : i32 to vector<32x128xi32>
    %17 = arith.andi %15, %16 : vector<32x128xi32>
    %18 = arith.xori %13, %17 : vector<32x128xi32>
    %c-2048144789_i32 = arith.constant -2048144789 : i32
    %19 = vector.broadcast %c-2048144789_i32 : i32 to vector<32x128xi32>
    %20 = arith.muli %18, %19 : vector<32x128xi32>
    %c13_i32 = arith.constant 13 : i32
    %21 = vector.broadcast %c13_i32 : i32 to vector<32x128xi32>
    %22 = arith.shrsi %20, %21 : vector<32x128xi32>
    %c524287_i32 = arith.constant 524287 : i32
    %23 = vector.broadcast %c524287_i32 : i32 to vector<32x128xi32>
    %24 = arith.andi %22, %23 : vector<32x128xi32>
    %25 = arith.xori %20, %24 : vector<32x128xi32>
    %c-1028477387_i32 = arith.constant -1028477387 : i32
    %26 = vector.broadcast %c-1028477387_i32 : i32 to vector<32x128xi32>
    %27 = arith.muli %25, %26 : vector<32x128xi32>
    %c16_i32_0 = arith.constant 16 : i32
    %28 = vector.broadcast %c16_i32_0 : i32 to vector<32x128xi32>
    %29 = arith.shrsi %27, %28 : vector<32x128xi32>
    %c65535_i32_1 = arith.constant 65535 : i32
    %30 = vector.broadcast %c65535_i32_1 : i32 to vector<32x128xi32>
    %31 = arith.andi %29, %30 : vector<32x128xi32>
    %32 = arith.xori %27, %31 : vector<32x128xi32>
    %c16777215_i32 = arith.constant 16777215 : i32
    %33 = vector.broadcast %c16777215_i32 : i32 to vector<32x128xi32>
    %34 = arith.andi %32, %33 : vector<32x128xi32>
    %35 = arith.sitofp %34 : vector<32x128xi32> to vector<32x128xf32>
    %cst = arith.constant 5.36441789E-8 : f32
    %36 = vector.broadcast %cst : f32 to vector<32x128xf32>
    %37 = arith.mulf %35, %36 : vector<32x128xf32>
    %c0_2 = arith.constant 0 : index
    %c0_3 = arith.constant 0 : index
    %38 = vector.load %arg2[%c0_2, %c0_3] : memref<32x128xf32, #tpu.memory_space<vmem>>, vector<32x128xf32>
    %39 = arith.addf %38, %37 : vector<32x128xf32>
    %c0_4 = arith.constant 0 : index
    %c0_5 = arith.constant 0 : index
    %40 = vector.load %arg3[%c0_4, %c0_5] : memref<32x128xf32, #tpu.memory_space<vmem>>, vector<32x128xf32>
    tpu.vector_store %arg3[%c0_4, %c0_5], %39 {strides = array<i32>} : memref<32x128xf32, #tpu.memory_space<vmem>>, vector<32x128xf32>,
    return
  }
  func.func @transform_0(%arg0: i32, %arg1: memref<1xi32, #tpu.memory_space<smem>>) -> (i32, i32) {
    %c0_i32 = arith.constant 0 : i32
    %c0_i32_0 = arith.constant 0 : i32
    return %arg0, %c0_i32 : i32, i32
  }
  func.func @transform_1(%arg0: i32, %arg1: memref<1xi32, #tpu.memory_space<smem>>) -> (i32, i32) {
    %c0_i32 = arith.constant 0 : i32
    %c0_i32_0 = arith.constant 0 : i32
    return %arg0, %c0_i32 : i32, i32
  }
}

module attributes {stable_mosaic.version = 11 : i64} {
  func.func @_noise_add_kernel(%arg0: i32, %arg1: memref<1xi32, #tpu.memory_space<smem>>, %arg2: memref<32x128xf32, #tpu.memory_space<vmem>>, %arg3: memref<32x128xf32, #tpu.memory_space<vmem>>) attributes {dimension_semantics = [#tpu.dimension_semantics<parallel>], iteration_bounds = array<i64: 1>, scalar_prefetch = 1 : i64, scratch_operands = 0 : i64, tpu.core_type = #tpu.core_type<tc>, window_params = [{transform_indices = @transform_0, window_bounds = array<i64: 32, 128>}, {transform_indices = @transform_1, window_bounds = array<i64: 32, 128>}]} {
    %c0 = arith.constant 0 : index
    %0 = memref.load %arg1[%c0] : memref<1xi32, #tpu.memory_space<smem>>
    %c9022413_i32 = arith.constant 9022413 : i32
    %1 = arith.addi %0, %c9022413_i32 : i32
    %2 = tpu.iota {dimensions = array<i32: 0>} : vector<32x128xi32>
    %3 = tpu.iota {dimensions = array<i32: 1>} : vector<32x128xi32>
    %c32_i32 = arith.constant 32 : i32
    %4 = arith.muli %arg0, %c32_i32 : i32
    %5 = vector.broadcast %4 : i32 to vector<32x128xi32>
    %6 = arith.addi %5, %2 : vector<32x128xi32>
    %c128_i32 = arith.constant 128 : i32
    %7 = vector.broadcast %c128_i32 : i32 to vector<32x128xi32>
    %8 = arith.muli %6, %7 : vector<32x128xi32>
    %9 = arith.addi %8, %3 : vector<32x128xi32>
    %10 = vector.broadcast %1 : i32 to vector<32x128xi32>
    %11 = arith.xori %9, %10 : vector<32x128xi32>
    %c-1640531527_i32 = arith.constant -1640531527 : i32
    %12 = vector.broadcast %c-1640531527_i32 : i32 to vector<32x128xi32>
    %13 = arith.muli %11, %12 : vector<32x128xi32>
    %c16_i32 = arith.constant 16 : i32
    %14 = vector.broadcast %c16_i32 : i32 to vector<32x128xi32>
    %15 = arith.shrsi %13, %14 : vector<32x128xi32>
    %c65535_i32 = arith.constant 65535 : i32
    %16 = vector.broadcast %c65535_i32 : i32 to vector<32x128xi32>
    %17 = arith.andi %15, %16 : vector<32x128xi32>
    %18 = arith.xori %13, %17 : vector<32x128xi32>
    %c-2048144789_i32 = arith.constant -2048144789 : i32
    %19 = vector.broadcast %c-2048144789_i32 : i32 to vector<32x128xi32>
    %20 = arith.muli %18, %19 : vector<32x128xi32>
    %c13_i32 = arith.constant 13 : i32
    %21 = vector.broadcast %c13_i32 : i32 to vector<32x128xi32>
    %22 = arith.shrsi %20, %21 : vector<32x128xi32>
    %c524287_i32 = arith.constant 524287 : i32
    %23 = vector.broadcast %c524287_i32 : i32 to vector<32x128xi32>
    %24 = arith.andi %22, %23 : vector<32x128xi32>
    %25 = arith.xori %20, %24 : vector<32x128xi32>
    %c-1028477387_i32 = arith.constant -1028477387 : i32
    %26 = vector.broadcast %c-1028477387_i32 : i32 to vector<32x128xi32>
    %27 = arith.muli %25, %26 : vector<32x128xi32>
    %c16_i32_0 = arith.constant 16 : i32
    %28 = vector.broadcast %c16_i32_0 : i32 to vector<32x128xi32>
    %29 = arith.shrsi %27, %28 : vector<32x128xi32>
    %c65535_i32_1 = arith.constant 65535 : i32
    %30 = vector.broadcast %c65535_i32_1 : i32 to vector<32x128xi32>
    %31 = arith.andi %29, %30 : vector<32x128xi32>
    %32 = arith.xori %27, %31 : vector<32x128xi32>
    %c16777215_i32 = arith.constant 16777215 : i32
    %33 = vector.broadcast %c16777215_i32 : i32 to vector<32x128xi32>
    %34 = arith.andi %32, %33 : vector<32x128xi32>
    %35 = arith.sitofp %34 : vector<32x128xi32> to vector<32x128xf32>
    %cst = arith.constant 5.36441789E-8 : f32
    %36 = vector.broadcast %cst : f32 to vector<32x128xf32>
    %37 = arith.mulf %35, %36 : vector<32x128xf32>
    %c0_2 = arith.constant 0 : index
    %c0_3 = arith.constant 0 : index
    %38 = vector.load %arg2[%c0_2, %c0_3] : memref<32x128xf32, #tpu.memory_space<vmem>>, vector<32x128xf32>
    %39 = arith.addf %38, %37 : vector<32x128xf32>
    %c0_4 = arith.constant 0 : index
    %c0_5 = arith.constant 0 : index
    %40 = vector.load %arg3[%c0_4, %c0_5] : memref<32x128xf32, #tpu.memory_space<vmem>>, vector<32x128xf32>
    tpu.vector_store %arg3[%c0_4, %c0_5], %39 {strides = array<i32>} : memref<32x128xf32, #tpu.memory_space<vmem>>, vector<32x128xf32>,
    return
  }
  func.func @transform_0(%arg0: i32, %arg1: memref<1xi32, #tpu.memory_space<smem>>) -> (i32, i32) {
    %c0_i32 = arith.constant 0 : i32
    %c0_i32_0 = arith.constant 0 : i32
    return %arg0, %c0_i32 : i32, i32
  }
  func.func @transform_1(%arg0: i32, %arg1: memref<1xi32, #tpu.memory_space<smem>>) -> (i32, i32) {
    %c0_i32 = arith.constant 0 : i32
    %c0_i32_0 = arith.constant 0 : i32
    return %arg0, %c0_i32 : i32, i32
  }
}

</mosaic_0001>

<llo_original>
// kernel: graph_nvp_forward.2
$region0: #{graph_nvp_forward.2}
  #allocation0 [shape = 'u32[]', space=smem, size = 0x4, offset = 0x4, fixed_abs, tag = 'smem constant byte address 0x4 - core index']
  #allocation1 [shape = 'u32[144,128]{1,0:T(1,128)}', space=vmem, size = 0x12000, scoped, tag = 'internal scratch']
  #allocation2 [shape = 's32[1]{0}', space=sflag, size = 0x4, scoped, tag = 'scoped memory for graph_nvp_forward.2']
  #allocation3 [shape = 's32[1]{0:T(128)S(6)}', space=smem, size = 0x200, scoped, tag = 'prefetched SMEM operand 0']
  %s0 = inlined_call_operand.<no memory space> [shape: s32[1], index: 0, kind: input, shape index: {}]
  %s1 = inlined_call_operand.vmem [shape: f32[32,128], index: 1, kind: input, shape index: {}]
  %s2 = inlined_call_operand.vmem [shape: f32[32,128], index: 2, kind: output, shape index: {}]
  %s3 = sld [smem:[#allocation0]]
  $region14: #{graph_nvp_forward.2} parent=0
    _
  %s5 = ssub.s32 1, %s3
  %s6 = scalar_select 0, %s5, %s3
  %7 = sst [smem:[#allocation3]] %s0
  // Predicated region
  $region2: #{graph_nvp_forward.2} parent=0 // pred_check
    _
  $region3: #{graph_nvp_forward.2} parent=0 // pred_check_branch
    %9 = sbr.rel (0) target = $region5
  $region4: #{graph_nvp_forward.2} parent=0 // pred_region
    _
  $region5: #{graph_nvp_forward.2} parent=0 // pred_fallthru
    _
  %s10 = sld [smem:[#allocation3]]
  %s11 = sadd.s32 %s10, 19088743
  %v12 = vlaneseq
  %v13 = vshrl.u32 %v12, 7
  %v14 = vadd.s32 %v13, 8
  %v15 = vadd.s32 %v13, 16
  %v16 = vadd.s32 %v13, 24
  %v17 = vlaneseq
  %v18 = vand.u32 %v17, 127
  %s19 = smul.u32 0, 32
  %v20 = vstv %s19
  %v21 = vadd.s32 %v20, %v13
  %v22 = vadd.s32 %v20, %v14
  %v23 = vadd.s32 %v20, %v15
  %v24 = vadd.s32 %v20, %v16
  %v25 = vmul.u32 %v21, 128
  %v26 = vmul.u32 %v22, 128
  %v27 = vmul.u32 %v23, 128
  %v28 = vmul.u32 %v24, 128
  %v29 = vadd.s32 %v25, %v18
  %v30 = vadd.s32 %v26, %v18
  %v31 = vadd.s32 %v27, %v18
  %v32 = vadd.s32 %v28, %v18
  %v33 = vstv %s11
  %v34 = vxor.u32 %v29, %v33
  %v35 = vxor.u32 %v30, %v33
  %v36 = vxor.u32 %v31, %v33
  %v37 = vxor.u32 %v32, %v33
  %v38 = vmul.u32 %v34, 2654435769
  %v39 = vmul.u32 %v35, 2654435769
  %v40 = vmul.u32 %v36, 2654435769
  %v41 = vmul.u32 %v37, 2654435769
  %v42 = vshra.s32 %v38, 16
  %v43 = vshra.s32 %v39, 16
  %v44 = vshra.s32 %v40, 16
  %v45 = vshra.s32 %v41, 16
  %v46 = vand.u32 %v42, 65535
  %v47 = vand.u32 %v43, 65535
  %v48 = vand.u32 %v44, 65535
  %v49 = vand.u32 %v45, 65535
  %v50 = vxor.u32 %v38, %v46
  %v51 = vxor.u32 %v39, %v47
  %v52 = vxor.u32 %v40, %v48
  %v53 = vxor.u32 %v41, %v49
  %v54 = vmul.u32 %v50, 2246822507
  %v55 = vmul.u32 %v51, 2246822507
  %v56 = vmul.u32 %v52, 2246822507
  %v57 = vmul.u32 %v53, 2246822507
  %v58 = vshra.s32 %v54, 13
  %v59 = vshra.s32 %v55, 13
  %v60 = vshra.s32 %v56, 13
  %v61 = vshra.s32 %v57, 13
  %v62 = vand.u32 %v58, 524287
  %v63 = vand.u32 %v59, 524287
  %v64 = vand.u32 %v60, 524287
  %v65 = vand.u32 %v61, 524287
  %v66 = vxor.u32 %v54, %v62
  %v67 = vxor.u32 %v55, %v63
  %v68 = vxor.u32 %v56, %v64
  %v69 = vxor.u32 %v57, %v65
  %v70 = vmul.u32 %v66, 3266489909
  %v71 = vmul.u32 %v67, 3266489909
  %v72 = vmul.u32 %v68, 3266489909
  %v73 = vmul.u32 %v69, 3266489909
  %v74 = vshra.s32 %v70, 16
  %v75 = vshra.s32 %v71, 16
  %v76 = vshra.s32 %v72, 16
  %v77 = vshra.s32 %v73, 16
  %v78 = vand.u32 %v74, 65535
  %v79 = vand.u32 %v75, 65535
  %v80 = vand.u32 %v76, 65535
  %v81 = vand.u32 %v77, 65535
  %v82 = vxor.u32 %v70, %v78
  %v83 = vxor.u32 %v71, %v79
  %v84 = vxor.u32 %v72, %v80
  %v85 = vxor.u32 %v73, %v81
  %v86 = vand.u32 %v82, 16777215
  %v87 = vand.u32 %v83, 16777215
  %v88 = vand.u32 %v84, 16777215
  %v89 = vand.u32 %v85, 16777215
  %v90 = vcvt.s32.f32 %v86
  %v91 = vcvt.s32.f32 %v87
  %v92 = vcvt.s32.f32 %v88
  %v93 = vcvt.s32.f32 %v89
  %v94 = vmul.f32 %v90, 5.364418e-08
  %v95 = vmul.f32 %v91, 5.364418e-08
  %v96 = vmul.f32 %v92, 5.364418e-08
  %v97 = vmul.f32 %v93, 5.364418e-08
  %v98 = vld [vmem:[%s1] sm:$0xff]
  %v99 = vld [vmem:[%s1 + $0x8] sm:$0xff]
  %v100 = vld [vmem:[%s1 + $0x10] sm:$0xff]
  %v101 = vld [vmem:[%s1 + $0x18] sm:$0xff]
  %v102 = vadd.f32 %v98, %v94
  %v103 = vadd.f32 %v99, %v95
  %v104 = vadd.f32 %v100, %v96
  %v105 = vadd.f32 %v101, %v97
  %106 = vst [vmem:[%s2] sm:$0xff] %v102
  %107 = vst [vmem:[%s2 + $0x8] sm:$0xff] %v103
  %108 = vst [vmem:[%s2 + $0x10] sm:$0xff] %v104
  %109 = vst [vmem:[%s2 + $0x18] sm:$0xff] %v105
  // Predicated region
  $region6: #{graph_nvp_forward.2} parent=0 // pred_check
    _
  $region7: #{graph_nvp_forward.2} parent=0 // pred_check_branch
    %111 = sbr.rel (0) target = $region9
  $region8: #{graph_nvp_forward.2} parent=0 // pred_region
    _
  $region9: #{graph_nvp_forward.2} parent=0 // pred_fallthru
    _
  // Predicated region
  $region10: #{graph_nvp_forward.2} parent=0 // pred_check
    _
  $region11: #{graph_nvp_forward.2} parent=0 // pred_check_branch
    %113 = sbr.rel (0) target = $region13
  $region12: #{graph_nvp_forward.2} parent=0 // pred_region
    _
  $region13: #{graph_nvp_forward.2} parent=0 // pred_fallthru
    _

// kernel: graph_nvp_forward.3
$region0: #{graph_nvp_forward.3}
  #allocation0 [shape = 'u32[]', space=smem, size = 0x4, offset = 0x4, fixed_abs, tag = 'smem constant byte address 0x4 - core index']
  #allocation1 [shape = 'u32[144,128]{1,0:T(1,128)}', space=vmem, size = 0x12000, scoped, tag = 'internal scratch']
  #allocation2 [shape = 's32[1]{0}', space=sflag, size = 0x4, scoped, tag = 'scoped memory for graph_nvp_forward.3']
  #allocation3 [shape = 's32[1]{0:T(128)S(6)}', space=smem, size = 0x200, scoped, tag = 'prefetched SMEM operand 0']
  %s0 = inlined_call_operand.<no memory space> [shape: s32[1], index: 0, kind: input, shape index: {}]
  %s1 = inlined_call_operand.vmem [shape: f32[32,128], index: 1, kind: input, shape index: {}]
  %s2 = inlined_call_operand.vmem [shape: f32[32,128], index: 2, kind: output, shape index: {}]
  %s3 = sld [smem:[#allocation0]]
  $region14: #{graph_nvp_forward.3} parent=0
    _
  %s5 = ssub.s32 1, %s3
  %s6 = scalar_select 0, %s5, %s3
  %7 = sst [smem:[#allocation3]] %s0
  // Predicated region
  $region2: #{graph_nvp_forward.3} parent=0 // pred_check
    _
  $region3: #{graph_nvp_forward.3} parent=0 // pred_check_branch
    %9 = sbr.rel (0) target = $region5
  $region4: #{graph_nvp_forward.3} parent=0 // pred_region
    _
  $region5: #{graph_nvp_forward.3} parent=0 // pred_fallthru
    _
  %s10 = sld [smem:[#allocation3]]
  %s11 = sadd.s32 %s10, 9022413
  %v12 = vlaneseq
  %v13 = vshrl.u32 %v12, 7
  %v14 = vadd.s32 %v13, 8
  %v15 = vadd.s32 %v13, 16
  %v16 = vadd.s32 %v13, 24
  %v17 = vlaneseq
  %v18 = vand.u32 %v17, 127
  %s19 = smul.u32 0, 32
  %v20 = vstv %s19
  %v21 = vadd.s32 %v20, %v13
  %v22 = vadd.s32 %v20, %v14
  %v23 = vadd.s32 %v20, %v15
  %v24 = vadd.s32 %v20, %v16
  %v25 = vmul.u32 %v21, 128
  %v26 = vmul.u32 %v22, 128
  %v27 = vmul.u32 %v23, 128
  %v28 = vmul.u32 %v24, 128
  %v29 = vadd.s32 %v25, %v18
  %v30 = vadd.s32 %v26, %v18
  %v31 = vadd.s32 %v27, %v18
  %v32 = vadd.s32 %v28, %v18
  %v33 = vstv %s11
  %v34 = vxor.u32 %v29, %v33
  %v35 = vxor.u32 %v30, %v33
  %v36 = vxor.u32 %v31, %v33
  %v37 = vxor.u32 %v32, %v33
  %v38 = vmul.u32 %v34, 2654435769
  %v39 = vmul.u32 %v35, 2654435769
  %v40 = vmul.u32 %v36, 2654435769
  %v41 = vmul.u32 %v37, 2654435769
  %v42 = vshra.s32 %v38, 16
  %v43 = vshra.s32 %v39, 16
  %v44 = vshra.s32 %v40, 16
  %v45 = vshra.s32 %v41, 16
  %v46 = vand.u32 %v42, 65535
  %v47 = vand.u32 %v43, 65535
  %v48 = vand.u32 %v44, 65535
  %v49 = vand.u32 %v45, 65535
  %v50 = vxor.u32 %v38, %v46
  %v51 = vxor.u32 %v39, %v47
  %v52 = vxor.u32 %v40, %v48
  %v53 = vxor.u32 %v41, %v49
  %v54 = vmul.u32 %v50, 2246822507
  %v55 = vmul.u32 %v51, 2246822507
  %v56 = vmul.u32 %v52, 2246822507
  %v57 = vmul.u32 %v53, 2246822507
  %v58 = vshra.s32 %v54, 13
  %v59 = vshra.s32 %v55, 13
  %v60 = vshra.s32 %v56, 13
  %v61 = vshra.s32 %v57, 13
  %v62 = vand.u32 %v58, 524287
  %v63 = vand.u32 %v59, 524287
  %v64 = vand.u32 %v60, 524287
  %v65 = vand.u32 %v61, 524287
  %v66 = vxor.u32 %v54, %v62
  %v67 = vxor.u32 %v55, %v63
  %v68 = vxor.u32 %v56, %v64
  %v69 = vxor.u32 %v57, %v65
  %v70 = vmul.u32 %v66, 3266489909
  %v71 = vmul.u32 %v67, 3266489909
  %v72 = vmul.u32 %v68, 3266489909
  %v73 = vmul.u32 %v69, 3266489909
  %v74 = vshra.s32 %v70, 16
  %v75 = vshra.s32 %v71, 16
  %v76 = vshra.s32 %v72, 16
  %v77 = vshra.s32 %v73, 16
  %v78 = vand.u32 %v74, 65535
  %v79 = vand.u32 %v75, 65535
  %v80 = vand.u32 %v76, 65535
  %v81 = vand.u32 %v77, 65535
  %v82 = vxor.u32 %v70, %v78
  %v83 = vxor.u32 %v71, %v79
  %v84 = vxor.u32 %v72, %v80
  %v85 = vxor.u32 %v73, %v81
  %v86 = vand.u32 %v82, 16777215
  %v87 = vand.u32 %v83, 16777215
  %v88 = vand.u32 %v84, 16777215
  %v89 = vand.u32 %v85, 16777215
  %v90 = vcvt.s32.f32 %v86
  %v91 = vcvt.s32.f32 %v87
  %v92 = vcvt.s32.f32 %v88
  %v93 = vcvt.s32.f32 %v89
  %v94 = vmul.f32 %v90, 5.364418e-08
  %v95 = vmul.f32 %v91, 5.364418e-08
  %v96 = vmul.f32 %v92, 5.364418e-08
  %v97 = vmul.f32 %v93, 5.364418e-08
  %v98 = vld [vmem:[%s1] sm:$0xff]
  %v99 = vld [vmem:[%s1 + $0x8] sm:$0xff]
  %v100 = vld [vmem:[%s1 + $0x10] sm:$0xff]
  %v101 = vld [vmem:[%s1 + $0x18] sm:$0xff]
  %v102 = vadd.f32 %v98, %v94
  %v103 = vadd.f32 %v99, %v95
  %v104 = vadd.f32 %v100, %v96
  %v105 = vadd.f32 %v101, %v97
  %106 = vst [vmem:[%s2] sm:$0xff] %v102
  %107 = vst [vmem:[%s2 + $0x8] sm:$0xff] %v103
  %108 = vst [vmem:[%s2 + $0x10] sm:$0xff] %v104
  %109 = vst [vmem:[%s2 + $0x18] sm:$0xff] %v105
  // Predicated region
  $region6: #{graph_nvp_forward.3} parent=0 // pred_check
    _
  $region7: #{graph_nvp_forward.3} parent=0 // pred_check_branch
    %111 = sbr.rel (0) target = $region9
  $region8: #{graph_nvp_forward.3} parent=0 // pred_region
    _
  $region9: #{graph_nvp_forward.3} parent=0 // pred_fallthru
    _
  // Predicated region
  $region10: #{graph_nvp_forward.3} parent=0 // pred_check
    _
  $region11: #{graph_nvp_forward.3} parent=0 // pred_check_branch
    %113 = sbr.rel (0) target = $region13
  $region12: #{graph_nvp_forward.3} parent=0 // pred_region
    _
  $region13: #{graph_nvp_forward.3} parent=0 // pred_fallthru
    _

</llo_original>
